<compile_context>
chip_gen: v5e
topology: v5e:2x2
jax: 0.10.0
libtpu: 0.0.40
codegen_flags: <defaults>
</compile_context>

<pallas_src>
import functools

import jax
import jax.numpy as jnp
from jax.experimental import pallas as pl
from jax.experimental.pallas import tpu as pltpu

LANE = 128           # minimum lane padding (v5e MXU width)
WIDE_LANE = 256      # lane padding for big dims (v6e/v7x MXU width)
MAX_BATCH_TILE = 512  # largest batch tile (rows) per grid step


def _round_up(n, m):
    return ((n + m - 1) // m) * m


def _pad_dim(d):
    """Lane padding for a feature dim: 128 for tiny dims, 256-multiples for
    larger ones (fills a full 256-wide MXU push on v6e/v7x)."""
    return LANE if d <= LANE else _round_up(d, WIDE_LANE)


def _sublane_multiple(dtype):
    """Minimum second-to-last-dim tile multiple: 8 (f32), 16 (bf16), 32 (i8)."""
    return max(8, 32 // jnp.dtype(dtype).itemsize)


# Detect whether this JAX exposes per-BlockSpec pipeline_mode (pl.Buffered).
try:
    pl.BlockSpec((8, 128), lambda i: (0, 0), pipeline_mode=pl.Buffered(1))
    _HAS_PIPELINE_MODE = True
except Exception:  # older JAX without pipeline_mode / Buffered
    _HAS_PIPELINE_MODE = False


def _const_block_spec(shape, single_buffer):
    """BlockSpec for an operand with a constant index_map (VMEM-resident).

    Single-buffering it halves its VMEM footprint (it never changes across
    grid steps, so double-buffering buys nothing)."""
    if single_buffer and _HAS_PIPELINE_MODE:
        return pl.BlockSpec(shape, lambda i: (0, 0), pipeline_mode=pl.Buffered(1))
    return pl.BlockSpec(shape, lambda i: (0, 0))


def _fused_mlp_kernel(*refs, num_layers: int):
    """refs = (x_ref, w0, b0, w1, b1, ..., w_{L-1}, b_{L-1}, o_ref).

    x_ref: (Bt, D0p); w_i: (Dip, D{i+1}p) pre-transposed; b_i: (1, D{i+1}p).
    Chains y = relu(y @ W + b) for all layers (no ReLU on the last); matmuls
    run in the weight dtype with f32 MXU accumulation.  Intermediates never
    leave vregs/VMEM.
    """
    x_ref = refs[0]
    o_ref = refs[-1]
    wb = refs[1:-1]

    h = x_ref[...]
    for i in range(num_layers):
        w = wb[2 * i][...]
        b = wb[2 * i + 1][...]
        acc = jnp.dot(h, w, preferred_element_type=jnp.float32)
        acc = acc + b.astype(jnp.float32)
        if i < num_layers - 1:
            acc = jnp.maximum(acc, 0.0)
            h = acc.astype(w.dtype)  # keep the next MXU pass in compute dtype
        else:
            h = acc
    o_ref[...] = h.astype(o_ref.dtype)


def prepare_params(params, compute_dtype=jnp.float32):
    """One-time prep (call at init, NOT per forward): transpose weights to
    [Din, Dout], zero-pad feature dims, cast to the compute dtype.

    Zero-padding is numerically exact for Linear + ReLU chains.
    """
    padded = []
    for w, b in params:
        dout, din = w.shape
        din_p, dout_p = _pad_dim(din), _pad_dim(dout)
        wt = jnp.zeros((din_p, dout_p), compute_dtype).at[:din, :dout].set(
            w.T.astype(compute_dtype))
        bp = jnp.zeros((1, dout_p), compute_dtype).at[0, :dout].set(
            b.astype(compute_dtype))
        padded.append((wt, bp))
    return padded


def _choose_batch_tiling(batch, sublane):
    """Pick (tile_rows, padded_batch, num_tiles).

    - tiles no larger than MAX_BATCH_TILE (big tiles -> ~85% of HBM roofline,
      fewer ~0.35 us grid-step overheads),
    - >=2 tiles when batch > 128 so v7x's second TensorCore gets work,
    - tile rounded to the dtype's sublane multiple, sized to minimize tail pad.
    """
    n_tiles = max(1, -(-batch // MAX_BATCH_TILE))
    if batch > 128:
        n_tiles = max(n_tiles, 2)
    bt = _round_up(-(-batch // n_tiles), sublane)
    return bt, bt * n_tiles, n_tiles


def _vmem_limit_bytes(padded, bt, din_pad, dout_pad, act_itemsize, single_buffer):
    """Explicit scoped-VMEM request: weights (+double-buffer factor if not
    single-buffered) + double-buffered I/O tiles + f32 intermediates, with
    50% headroom; never below the 32 MiB default, capped below v7x physical."""
    w_mult = 1 if (single_buffer and _HAS_PIPELINE_MODE) else 2
    w_bytes = w_mult * sum(
        int(w.size) * w.dtype.itemsize + int(b.size) * b.dtype.itemsize
        for w, b in padded)
    io_bytes = 2 * bt * din_pad * act_itemsize + 2 * bt * dout_pad * act_itemsize
    widest = max(int(w.shape[1]) for w, _ in padded)
    inter_bytes = 2 * bt * widest * 4  # f32 intermediates
    total = int(1.5 * (w_bytes + io_bytes + inter_bytes)) + (2 << 20)
    # TODO(synk): for padded weights > ~48 MiB (v7x has only 64 MiB VMEM),
    # switch to streamed weights: memory_space=pl.ANY + manual double-buffered
    # pltpu.make_async_copy of layer i+1's weights while computing layer i.
    return max(32 << 20, min(total, 60 << 20))


@functools.partial(jax.jit, static_argnames=("output_size", "single_buffer_weights"))
def linear_qnet_forward(padded_params, x, *, output_size, single_buffer_weights=True):
    """Forward pass matching LinearQNet.forward, as one fused Pallas kernel.

    `padded_params` must come from prepare_params() (done once at init).
    """
    batch, din = x.shape
    num_layers = len(padded_params)
    din_pad = padded_params[0][0].shape[0]
    dout_pad = padded_params[-1][0].shape[1]

    sublane = _sublane_multiple(x.dtype)
    bt, batch_pad, n_tiles = _choose_batch_tiling(batch, sublane)
    xp = jnp.zeros((batch_pad, din_pad), x.dtype).at[:batch, :din].set(x)

    in_specs = [pl.BlockSpec((bt, din_pad), lambda i: (i, 0))]
    operands = [xp]
    for wt, bp in padded_params:
        # Constant index maps: weights/biases DMA once and stay VMEM-resident.
        in_specs.append(_const_block_spec(wt.shape, single_buffer_weights))
        in_specs.append(_const_block_spec(bp.shape, single_buffer_weights))
        operands.extend([wt, bp])

    kernel = functools.partial(_fused_mlp_kernel, num_layers=num_layers)
    out_padded = pl.pallas_call(
        kernel,
        out_shape=jax.ShapeDtypeStruct((batch_pad, dout_pad), x.dtype),
        grid=(n_tiles,),
        in_specs=in_specs,
        out_specs=pl.BlockSpec((bt, dout_pad), lambda i: (i, 0)),
        compiler_params=pltpu.CompilerParams(
            dimension_semantics=("parallel",),
            vmem_limit_bytes=_vmem_limit_bytes(
                padded_params, bt, din_pad, dout_pad,
                jnp.dtype(x.dtype).itemsize, single_buffer_weights)),
    )(*operands)

    return out_padded[:batch, :output_size]


def init_params(key, input_size, hidden_sizes, output_size, dtype=jnp.float32):
    """Deterministic PyTorch-style (uniform +/- 1/sqrt(fan_in)) init.

    Weights stored in PyTorch convention [out_features, in_features]; they are
    transposed/padded once by prepare_params() before the fused kernel runs.
    """
    sizes = [input_size] + list(hidden_sizes) + [output_size]
    params = []
    for i in range(len(sizes) - 1):
        fan_in, fan_out = sizes[i], sizes[i + 1]
        key, kw, kb = jax.random.split(key, 3)
        bound = 1.0 / jnp.sqrt(jnp.asarray(fan_in, dtype))
        w = jax.random.uniform(kw, (fan_out, fan_in), dtype, -bound, bound)
        b = jax.random.uniform(kb, (fan_out,), dtype, -bound, bound)
        params.append((w, b))
    return params


if __name__ == "__main__":
    # TODO(synk): saveModel/loadModel (torch checkpoint I/O) intentionally not
    # reproduced; parameters are initialized deterministically in-script.
    key = jax.random.PRNGKey(0)
    input_size = 16
    hidden_sizes = [32, 32]
    output_size = 8
    batch = 4

    pkey, xkey = jax.random.split(key)
    params = init_params(pkey, input_size, hidden_sizes, output_size)
    x = jax.random.normal(xkey, (batch, input_size), dtype=jnp.float32)

    # Plain-JAX reference (matches LinearQNet.forward).
    ref = x
    for i, (w, b) in enumerate(params):
        ref = ref @ w.T + b
        if i < len(params) - 1:
            ref = jnp.maximum(ref, 0.0)

    # ---------- float32 path (exact match to the PyTorch module) ----------
    prepared = prepare_params(params)  # once at init, NOT per call
    try:
        out = linear_qnet_forward(prepared, x, output_size=output_size)
        out = jax.block_until_ready(out)
    except Exception:
        # Fallback if single-buffered (Buffered(1)) weight specs are unsupported.
        out = linear_qnet_forward(prepared, x, output_size=output_size,
                                  single_buffer_weights=False)
        out = jax.block_until_ready(out)

    assert out.shape == (batch, output_size)
    assert jnp.allclose(out, ref, atol=1e-5, rtol=1e-5)

    # ---------- bfloat16 compute path (f32 MXU accumulation) ----------
    prepared_bf16 = prepare_params(params, compute_dtype=jnp.bfloat16)
    x_bf16 = x.astype(jnp.bfloat16)
    try:
        out_bf16 = linear_qnet_forward(prepared_bf16, x_bf16,
                                       output_size=output_size)
        out_bf16 = jax.block_until_ready(out_bf16)
    except Exception:
        out_bf16 = linear_qnet_forward(prepared_bf16, x_bf16,
                                       output_size=output_size,
                                       single_buffer_weights=False)
        out_bf16 = jax.block_until_ready(out_bf16)

    out_bf16 = out_bf16.astype(jnp.float32)
    assert out_bf16.shape == (batch, output_size)
    assert jnp.allclose(out_bf16, ref, atol=5e-2, rtol=5e-2)

    print("KERNEL_OK")
</pallas_src>

<mosaic_0001>
module attributes {stable_mosaic.version = 11 : i64} {
  func.func @_fused_mlp_kernel(%arg0: i32, %arg1: memref<8x128xf32, #tpu.memory_space<vmem>>, %arg2: memref<128x128xf32, #tpu.memory_space<vmem>>, %arg3: memref<1x128xf32, #tpu.memory_space<vmem>>, %arg4: memref<128x128xf32, #tpu.memory_space<vmem>>, %arg5: memref<1x128xf32, #tpu.memory_space<vmem>>, %arg6: memref<128x128xf32, #tpu.memory_space<vmem>>, %arg7: memref<1x128xf32, #tpu.memory_space<vmem>>, %arg8: memref<8x128xf32, #tpu.memory_space<vmem>>) attributes {dimension_semantics = [#tpu.dimension_semantics<parallel>], iteration_bounds = array<i64: 1>, scalar_prefetch = 0 : i64, scratch_operands = 0 : i64, tpu.core_type = #tpu.core_type<tc>, window_params = [{transform_indices = @transform_0, window_bounds = array<i64: 8, 128>}, {pipeline_mode = #tpu.pipeline_mode<synchronous>, transform_indices = @transform_1, window_bounds = array<i64: 128, 128>}, {pipeline_mode = #tpu.pipeline_mode<synchronous>, transform_indices = @transform_2, window_bounds = array<i64: 1, 128>}, {pipeline_mode = #tpu.pipeline_mode<synchronous>, transform_indices = @transform_3, window_bounds = array<i64: 128, 128>}, {pipeline_mode = #tpu.pipeline_mode<synchronous>, transform_indices = @transform_4, window_bounds = array<i64: 1, 128>}, {pipeline_mode = #tpu.pipeline_mode<synchronous>, transform_indices = @transform_5, window_bounds = array<i64: 128, 128>}, {pipeline_mode = #tpu.pipeline_mode<synchronous>, transform_indices = @transform_6, window_bounds = array<i64: 1, 128>}, {transform_indices = @transform_7, window_bounds = array<i64: 8, 128>}]} {
    %c0 = arith.constant 0 : index
    %c0_0 = arith.constant 0 : index
    %0 = vector.load %arg1[%c0, %c0_0] : memref<8x128xf32, #tpu.memory_space<vmem>>, vector<8x128xf32>
    %c0_1 = arith.constant 0 : index
    %c0_2 = arith.constant 0 : index
    %1 = vector.load %arg2[%c0_1, %c0_2] : memref<128x128xf32, #tpu.memory_space<vmem>>, vector<128x128xf32>
    %c0_3 = arith.constant 0 : index
    %c0_4 = arith.constant 0 : index
    %2 = vector.load %arg3[%c0_3, %c0_4] : memref<1x128xf32, #tpu.memory_space<vmem>>, vector<1x128xf32>
    %cst = arith.constant dense<0.000000e+00> : vector<8x128xf32>
    %3 = tpu.matmul %0, %1, %cst {dimension_numbers = #tpu.dot_dimension_numbers<[1], [0], [0], [1], [0, 0, 1, 1], [], []>} : vector<8x128xf32>, vector<128x128xf32>, vector<8x128xf32> -> vector<8x128xf32>
    %4 = vector.broadcast %2 : vector<1x128xf32> to vector<8x128xf32>
    %5 = arith.addf %3, %4 : vector<8x128xf32>
    %cst_5 = arith.constant 0.000000e+00 : f32
    %6 = vector.broadcast %cst_5 : f32 to vector<8x128xf32>
    %7 = arith.maximumf %5, %6 : vector<8x128xf32>
    %c0_6 = arith.constant 0 : index
    %c0_7 = arith.constant 0 : index
    %8 = vector.load %arg4[%c0_6, %c0_7] : memref<128x128xf32, #tpu.memory_space<vmem>>, vector<128x128xf32>
    %c0_8 = arith.constant 0 : index
    %c0_9 = arith.constant 0 : index
    %9 = vector.load %arg5[%c0_8, %c0_9] : memref<1x128xf32, #tpu.memory_space<vmem>>, vector<1x128xf32>
    %cst_10 = arith.constant dense<0.000000e+00> : vector<8x128xf32>
    %10 = tpu.matmul %7, %8, %cst_10 {dimension_numbers = #tpu.dot_dimension_numbers<[1], [0], [0], [1], [0, 0, 1, 1], [], []>} : vector<8x128xf32>, vector<128x128xf32>, vector<8x128xf32> -> vector<8x128xf32>
    %11 = vector.broadcast %9 : vector<1x128xf32> to vector<8x128xf32>
    %12 = arith.addf %10, %11 : vector<8x128xf32>
    %cst_11 = arith.constant 0.000000e+00 : f32
    %13 = vector.broadcast %cst_11 : f32 to vector<8x128xf32>
    %14 = arith.maximumf %12, %13 : vector<8x128xf32>
    %c0_12 = arith.constant 0 : index
    %c0_13 = arith.constant 0 : index
    %15 = vector.load %arg6[%c0_12, %c0_13] : memref<128x128xf32, #tpu.memory_space<vmem>>, vector<128x128xf32>
    %c0_14 = arith.constant 0 : index
    %c0_15 = arith.constant 0 : index
    %16 = vector.load %arg7[%c0_14, %c0_15] : memref<1x128xf32, #tpu.memory_space<vmem>>, vector<1x128xf32>
    %cst_16 = arith.constant dense<0.000000e+00> : vector<8x128xf32>
    %17 = tpu.matmul %14, %15, %cst_16 {dimension_numbers = #tpu.dot_dimension_numbers<[1], [0], [0], [1], [0, 0, 1, 1], [], []>} : vector<8x128xf32>, vector<128x128xf32>, vector<8x128xf32> -> vector<8x128xf32>
    %18 = vector.broadcast %16 : vector<1x128xf32> to vector<8x128xf32>
    %19 = arith.addf %17, %18 : vector<8x128xf32>
    %c0_17 = arith.constant 0 : index
    %c0_18 = arith.constant 0 : index
    %20 = vector.load %arg8[%c0_17, %c0_18] : memref<8x128xf32, #tpu.memory_space<vmem>>, vector<8x128xf32>
    tpu.vector_store %arg8[%c0_17, %c0_18], %19 {strides = array<i32>} : memref<8x128xf32, #tpu.memory_space<vmem>>, vector<8x128xf32>,
    return
  }
  func.func @transform_0(%arg0: i32) -> (i32, i32) {
    %c0_i32 = arith.constant 0 : i32
    %c0_i32_0 = arith.constant 0 : i32
    return %arg0, %c0_i32 : i32, i32
  }
  func.func @transform_1(%arg0: i32) -> (i32, i32) {
    %c0_i32 = arith.constant 0 : i32
    %c0_i32_0 = arith.constant 0 : i32
    %c0_i32_1 = arith.constant 0 : i32
    return %c0_i32, %c0_i32_0 : i32, i32
  }
  func.func @transform_2(%arg0: i32) -> (i32, i32) {
    %c0_i32 = arith.constant 0 : i32
    %c0_i32_0 = arith.constant 0 : i32
    %c0_i32_1 = arith.constant 0 : i32
    return %c0_i32, %c0_i32_0 : i32, i32
  }
  func.func @transform_3(%arg0: i32) -> (i32, i32) {
    %c0_i32 = arith.constant 0 : i32
    %c0_i32_0 = arith.constant 0 : i32
    %c0_i32_1 = arith.constant 0 : i32
    return %c0_i32, %c0_i32_0 : i32, i32
  }
  func.func @transform_4(%arg0: i32) -> (i32, i32) {
    %c0_i32 = arith.constant 0 : i32
    %c0_i32_0 = arith.constant 0 : i32
    %c0_i32_1 = arith.constant 0 : i32
    return %c0_i32, %c0_i32_0 : i32, i32
  }
  func.func @transform_5(%arg0: i32) -> (i32, i32) {
    %c0_i32 = arith.constant 0 : i32
    %c0_i32_0 = arith.constant 0 : i32
    %c0_i32_1 = arith.constant 0 : i32
    return %c0_i32, %c0_i32_0 : i32, i32
  }
  func.func @transform_6(%arg0: i32) -> (i32, i32) {
    %c0_i32 = arith.constant 0 : i32
    %c0_i32_0 = arith.constant 0 : i32
    %c0_i32_1 = arith.constant 0 : i32
    return %c0_i32, %c0_i32_0 : i32, i32
  }
  func.func @transform_7(%arg0: i32) -> (i32, i32) {
    %c0_i32 = arith.constant 0 : i32
    %c0_i32_0 = arith.constant 0 : i32
    return %arg0, %c0_i32 : i32, i32
  }
}

module attributes {stable_mosaic.version = 11 : i64} {
  func.func @_fused_mlp_kernel(%arg0: i32, %arg1: memref<8x128xf32, #tpu.memory_space<vmem>>, %arg2: memref<128x128xf32, #tpu.memory_space<vmem>>, %arg3: memref<1x128xf32, #tpu.memory_space<vmem>>, %arg4: memref<128x128xf32, #tpu.memory_space<vmem>>, %arg5: memref<1x128xf32, #tpu.memory_space<vmem>>, %arg6: memref<128x128xf32, #tpu.memory_space<vmem>>, %arg7: memref<1x128xf32, #tpu.memory_space<vmem>>, %arg8: memref<8x128xf32, #tpu.memory_space<vmem>>) attributes {dimension_semantics = [#tpu.dimension_semantics<parallel>], iteration_bounds = array<i64: 1>, scalar_prefetch = 0 : i64, scratch_operands = 0 : i64, tpu.core_type = #tpu.core_type<tc>, window_params = [{transform_indices = @transform_0, window_bounds = array<i64: 8, 128>}, {pipeline_mode = #tpu.pipeline_mode<synchronous>, transform_indices = @transform_1, window_bounds = array<i64: 128, 128>}, {pipeline_mode = #tpu.pipeline_mode<synchronous>, transform_indices = @transform_2, window_bounds = array<i64: 1, 128>}, {pipeline_mode = #tpu.pipeline_mode<synchronous>, transform_indices = @transform_3, window_bounds = array<i64: 128, 128>}, {pipeline_mode = #tpu.pipeline_mode<synchronous>, transform_indices = @transform_4, window_bounds = array<i64: 1, 128>}, {pipeline_mode = #tpu.pipeline_mode<synchronous>, transform_indices = @transform_5, window_bounds = array<i64: 128, 128>}, {pipeline_mode = #tpu.pipeline_mode<synchronous>, transform_indices = @transform_6, window_bounds = array<i64: 1, 128>}, {transform_indices = @transform_7, window_bounds = array<i64: 8, 128>}]} {
    %c0 = arith.constant 0 : index
    %c0_0 = arith.constant 0 : index
    %0 = vector.load %arg1[%c0, %c0_0] : memref<8x128xf32, #tpu.memory_space<vmem>>, vector<8x128xf32>
    %c0_1 = arith.constant 0 : index
    %c0_2 = arith.constant 0 : index
    %1 = vector.load %arg2[%c0_1, %c0_2] : memref<128x128xf32, #tpu.memory_space<vmem>>, vector<128x128xf32>
    %c0_3 = arith.constant 0 : index
    %c0_4 = arith.constant 0 : index
    %2 = vector.load %arg3[%c0_3, %c0_4] : memref<1x128xf32, #tpu.memory_space<vmem>>, vector<1x128xf32>
    %cst = arith.constant dense<0.000000e+00> : vector<8x128xf32>
    %3 = tpu.matmul %0, %1, %cst {dimension_numbers = #tpu.dot_dimension_numbers<[1], [0], [0], [1], [0, 0, 1, 1], [], []>} : vector<8x128xf32>, vector<128x128xf32>, vector<8x128xf32> -> vector<8x128xf32>
    %4 = vector.broadcast %2 : vector<1x128xf32> to vector<8x128xf32>
    %5 = arith.addf %3, %4 : vector<8x128xf32>
    %cst_5 = arith.constant 0.000000e+00 : f32
    %6 = vector.broadcast %cst_5 : f32 to vector<8x128xf32>
    %7 = arith.maximumf %5, %6 : vector<8x128xf32>
    %c0_6 = arith.constant 0 : index
    %c0_7 = arith.constant 0 : index
    %8 = vector.load %arg4[%c0_6, %c0_7] : memref<128x128xf32, #tpu.memory_space<vmem>>, vector<128x128xf32>
    %c0_8 = arith.constant 0 : index
    %c0_9 = arith.constant 0 : index
    %9 = vector.load %arg5[%c0_8, %c0_9] : memref<1x128xf32, #tpu.memory_space<vmem>>, vector<1x128xf32>
    %cst_10 = arith.constant dense<0.000000e+00> : vector<8x128xf32>
    %10 = tpu.matmul %7, %8, %cst_10 {dimension_numbers = #tpu.dot_dimension_numbers<[1], [0], [0], [1], [0, 0, 1, 1], [], []>} : vector<8x128xf32>, vector<128x128xf32>, vector<8x128xf32> -> vector<8x128xf32>
    %11 = vector.broadcast %9 : vector<1x128xf32> to vector<8x128xf32>
    %12 = arith.addf %10, %11 : vector<8x128xf32>
    %cst_11 = arith.constant 0.000000e+00 : f32
    %13 = vector.broadcast %cst_11 : f32 to vector<8x128xf32>
    %14 = arith.maximumf %12, %13 : vector<8x128xf32>
    %c0_12 = arith.constant 0 : index
    %c0_13 = arith.constant 0 : index
    %15 = vector.load %arg6[%c0_12, %c0_13] : memref<128x128xf32, #tpu.memory_space<vmem>>, vector<128x128xf32>
    %c0_14 = arith.constant 0 : index
    %c0_15 = arith.constant 0 : index
    %16 = vector.load %arg7[%c0_14, %c0_15] : memref<1x128xf32, #tpu.memory_space<vmem>>, vector<1x128xf32>
    %cst_16 = arith.constant dense<0.000000e+00> : vector<8x128xf32>
    %17 = tpu.matmul %14, %15, %cst_16 {dimension_numbers = #tpu.dot_dimension_numbers<[1], [0], [0], [1], [0, 0, 1, 1], [], []>} : vector<8x128xf32>, vector<128x128xf32>, vector<8x128xf32> -> vector<8x128xf32>
    %18 = vector.broadcast %16 : vector<1x128xf32> to vector<8x128xf32>
    %19 = arith.addf %17, %18 : vector<8x128xf32>
    %c0_17 = arith.constant 0 : index
    %c0_18 = arith.constant 0 : index
    %20 = vector.load %arg8[%c0_17, %c0_18] : memref<8x128xf32, #tpu.memory_space<vmem>>, vector<8x128xf32>
    tpu.vector_store %arg8[%c0_17, %c0_18], %19 {strides = array<i32>} : memref<8x128xf32, #tpu.memory_space<vmem>>, vector<8x128xf32>,
    return
  }
  func.func @transform_0(%arg0: i32) -> (i32, i32) {
    %c0_i32 = arith.constant 0 : i32
    %c0_i32_0 = arith.constant 0 : i32
    return %arg0, %c0_i32 : i32, i32
  }
  func.func @transform_1(%arg0: i32) -> (i32, i32) {
    %c0_i32 = arith.constant 0 : i32
    %c0_i32_0 = arith.constant 0 : i32
    %c0_i32_1 = arith.constant 0 : i32
    return %c0_i32, %c0_i32_0 : i32, i32
  }
  func.func @transform_2(%arg0: i32) -> (i32, i32) {
    %c0_i32 = arith.constant 0 : i32
    %c0_i32_0 = arith.constant 0 : i32
    %c0_i32_1 = arith.constant 0 : i32
    return %c0_i32, %c0_i32_0 : i32, i32
  }
  func.func @transform_3(%arg0: i32) -> (i32, i32) {
    %c0_i32 = arith.constant 0 : i32
    %c0_i32_0 = arith.constant 0 : i32
    %c0_i32_1 = arith.constant 0 : i32
    return %c0_i32, %c0_i32_0 : i32, i32
  }
  func.func @transform_4(%arg0: i32) -> (i32, i32) {
    %c0_i32 = arith.constant 0 : i32
    %c0_i32_0 = arith.constant 0 : i32
    %c0_i32_1 = arith.constant 0 : i32
    return %c0_i32, %c0_i32_0 : i32, i32
  }
  func.func @transform_5(%arg0: i32) -> (i32, i32) {
    %c0_i32 = arith.constant 0 : i32
    %c0_i32_0 = arith.constant 0 : i32
    %c0_i32_1 = arith.constant 0 : i32
    return %c0_i32, %c0_i32_0 : i32, i32
  }
  func.func @transform_6(%arg0: i32) -> (i32, i32) {
    %c0_i32 = arith.constant 0 : i32
    %c0_i32_0 = arith.constant 0 : i32
    %c0_i32_1 = arith.constant 0 : i32
    return %c0_i32, %c0_i32_0 : i32, i32
  }
  func.func @transform_7(%arg0: i32) -> (i32, i32) {
    %c0_i32 = arith.constant 0 : i32
    %c0_i32_0 = arith.constant 0 : i32
    return %arg0, %c0_i32 : i32, i32
  }
}

</mosaic_0001>

<llo_original>
// kernel: linear_qnet_forward.1
$region0: #{linear_qnet_forward.1}
  #allocation0 [shape = 'u32[]', space=smem, size = 0x4, offset = 0x4, fixed_abs, tag = 'smem constant byte address 0x4 - core index']
  #allocation1 [shape = 'u32[72,128]{1,0:T(1,128)}', space=vmem, size = 0x9000, scoped, tag = 'internal scratch']
  %s0 = inlined_call_operand.vmem [shape: f32[8,128], index: 0, kind: input, shape index: {}]
  %s1 = inlined_call_operand.hbm [shape: f32[128,128], index: 1, kind: input, shape index: {}]
  %s2 = inlined_call_operand.vmem [shape: f32[1,128], index: 2, kind: input, shape index: {}]
  %s3 = inlined_call_operand.hbm [shape: f32[128,128], index: 3, kind: input, shape index: {}]
  %s4 = inlined_call_operand.vmem [shape: f32[1,128], index: 4, kind: input, shape index: {}]
  %s5 = inlined_call_operand.hbm [shape: f32[128,128], index: 5, kind: input, shape index: {}]
  %s6 = inlined_call_operand.vmem [shape: f32[1,128], index: 6, kind: input, shape index: {}]
  %s7 = inlined_call_operand.vmem [shape: f32[8,128], index: 7, kind: output, shape index: {}]
  %s8 = sld [smem:[#allocation0]]
  $region50: #{linear_qnet_forward.1} parent=0
    _
  %s10 = ssub.s32 1, %s8
  %s11 = scalar_select 0, %s10, %s8
  $region1: #{linear_qnet_forward.1} parent=0
    #allocation2 [shape = 'u8[65536]{0}', space=vmem, size = 0x10000, scoped, tag = 'input window, operand 1, single buffered']
    #allocation3 [shape = 's32[1]{0}', space=sflag, size = 0x4, scoped, tag = 'scoped memory for linear_qnet_forward.1']
    #allocation4 [shape = 'u8[65536]{0}', space=vmem, size = 0x10000, scoped, tag = 'input window, operand 3, single buffered']
    #allocation5 [shape = 's32[1]{0}', space=sflag, size = 0x4, scoped, tag = 'scoped memory for linear_qnet_forward.1']
    #allocation6 [shape = 'u8[65536]{0}', space=vmem, size = 0x10000, scoped, tag = 'input window, operand 5, single buffered']
    %12 = vsyncpa [#allocation3], 0
    %13 = vsyncpa [#allocation5], 0
    // Predicated region
    $region2: #{linear_qnet_forward.1} parent=1 // pred_check
      _
    $region3: #{linear_qnet_forward.1} parent=1 // pred_check_branch
      %15 = sbr.rel (0) target = $region5
    $region4: #{linear_qnet_forward.1} parent=1 // pred_region
      _
    $region5: #{linear_qnet_forward.1} parent=1 // pred_fallthru
      _
    // Predicated region
    $region6: #{linear_qnet_forward.1} parent=1 // pred_check
      _
    $region7: #{linear_qnet_forward.1} parent=1 // pred_check_branch
      %17 = sbr.rel (0) target = $region9
    $region8: #{linear_qnet_forward.1} parent=1 // pred_region
      %19 = vsyncadd [#allocation3], 0
      %s20 = sshll.u32 %s1, 4
      %s21 = int_to_ptr.hbm [resolvable:$true] %s20
      %s22 = sshll.u32 [#allocation2], 4
      %s23 = int_to_ptr.vmem [resolvable:$true] %s22
      %28 = dma.hbm_to_vmem [thread:$0]  %s21, 2048, %s23, [#allocation3], 128, 128, 8
    $region9: #{linear_qnet_forward.1} parent=1 // pred_fallthru
      _
    // Predicated region
    $region10: #{linear_qnet_forward.1} parent=1 // pred_check
      _
    $region11: #{linear_qnet_forward.1} parent=1 // pred_check_branch
      %30 = sbr.rel (0) target = $region13
    $region12: #{linear_qnet_forward.1} parent=1 // pred_region
      _
    $region13: #{linear_qnet_forward.1} parent=1 // pred_fallthru
      _
    // Predicated region
    $region14: #{linear_qnet_forward.1} parent=1 // pred_check
      _
    $region15: #{linear_qnet_forward.1} parent=1 // pred_check_branch
      %32 = sbr.rel (0) target = $region17
    $region16: #{linear_qnet_forward.1} parent=1 // pred_region
      %34 = vsyncadd [#allocation5], 0
      %s35 = sshll.u32 %s3, 4
      %s36 = int_to_ptr.hbm [resolvable:$true] %s35
      %s37 = sshll.u32 [#allocation4], 4
      %s38 = int_to_ptr.vmem [resolvable:$true] %s37
      %43 = dma.hbm_to_vmem [thread:$0]  %s36, 2048, %s38, [#allocation5], 128, 128, 8
    $region17: #{linear_qnet_forward.1} parent=1 // pred_fallthru
      _
    // Predicated region
    $region18: #{linear_qnet_forward.1} parent=1 // pred_check
      _
    $region19: #{linear_qnet_forward.1} parent=1 // pred_check_branch
      %45 = sbr.rel (0) target = $region21
    $region20: #{linear_qnet_forward.1} parent=1 // pred_region
      _
    $region21: #{linear_qnet_forward.1} parent=1 // pred_fallthru
      _
    // Predicated region
    $region22: #{linear_qnet_forward.1} parent=1 // pred_check
      _
    $region23: #{linear_qnet_forward.1} parent=1 // pred_check_branch
      %47 = sbr.rel (0) target = $region25
    $region24: #{linear_qnet_forward.1} parent=1 // pred_region
      %49 = vsyncadd [#allocation5], 0
      %s50 = sshll.u32 %s5, 4
      %s51 = int_to_ptr.hbm [resolvable:$true] %s50
      %s52 = sshll.u32 [#allocation6], 4
      %s53 = int_to_ptr.vmem [resolvable:$true] %s52
      %58 = dma.hbm_to_vmem [thread:$0]  %s51, 2048, %s53, [#allocation5], 128, 128, 8
    $region25: #{linear_qnet_forward.1} parent=1 // pred_fallthru
      _
    // Predicated region
    $region26: #{linear_qnet_forward.1} parent=1 // pred_check
      _
    $region27: #{linear_qnet_forward.1} parent=1 // pred_check_branch
      %60 = sbr.rel (0) target = $region29
    $region28: #{linear_qnet_forward.1} parent=1 // pred_region
      _
    $region29: #{linear_qnet_forward.1} parent=1 // pred_fallthru
      _
    // Predicated region
    $region30: #{linear_qnet_forward.1} parent=1 // pred_check
      _
    $region31: #{linear_qnet_forward.1} parent=1 // pred_check_branch
      %62 = sbr.rel (0) target = $region33
    $region32: #{linear_qnet_forward.1} parent=1 // pred_region
      %64 = dma.done [#allocation3], 2048
    $region33: #{linear_qnet_forward.1} parent=1 // pred_fallthru
      _
    // Predicated region
    $region34: #{linear_qnet_forward.1} parent=1 // pred_check
      _
    $region35: #{linear_qnet_forward.1} parent=1 // pred_check_branch
      %66 = sbr.rel (0) target = $region37
    $region36: #{linear_qnet_forward.1} parent=1 // pred_region
      %68 = dma.done [#allocation5], 2048
    $region37: #{linear_qnet_forward.1} parent=1 // pred_fallthru
      _
    // Predicated region
    $region38: #{linear_qnet_forward.1} parent=1 // pred_check
      _
    $region39: #{linear_qnet_forward.1} parent=1 // pred_check_branch
      %70 = sbr.rel (0) target = $region41
    $region40: #{linear_qnet_forward.1} parent=1 // pred_region
      %72 = dma.done [#allocation5], 2048
    $region41: #{linear_qnet_forward.1} parent=1 // pred_fallthru
      _
    %v73 = vld [vmem:[%s0] sm:$0xff]
    %v74 = vld [vmem:[#allocation2] sm:$0xff]
    %v75 = vld [vmem:[#allocation2 + $0x8] sm:$0xff]
    %v76 = vld [vmem:[#allocation2 + $0x10] sm:$0xff]
    %v77 = vld [vmem:[#allocation2 + $0x18] sm:$0xff]
    %v78 = vld [vmem:[#allocation2 + $0x20] sm:$0xff]
    %v79 = vld [vmem:[#allocation2 + $0x28] sm:$0xff]
    %v80 = vld [vmem:[#allocation2 + $0x30] sm:$0xff]
    %v81 = vld [vmem:[#allocation2 + $0x38] sm:$0xff]
    %v82 = vld [vmem:[#allocation2 + $0x40] sm:$0xff]
    %v83 = vld [vmem:[#allocation2 + $0x48] sm:$0xff]
    %v84 = vld [vmem:[#allocation2 + $0x50] sm:$0xff]
    %v85 = vld [vmem:[#allocation2 + $0x58] sm:$0xff]
    %v86 = vld [vmem:[#allocation2 + $0x60] sm:$0xff]
    %v87 = vld [vmem:[#allocation2 + $0x68] sm:$0xff]
    %v88 = vld [vmem:[#allocation2 + $0x70] sm:$0xff]
    %v89 = vld [vmem:[#allocation2 + $0x78] sm:$0xff]
    %v90 = vld [vmem:[%s2] sm:$0x1]
    %v92 = vperm.slane %v90, 0
    %94 = vmatpush.msra.mxu0 %v89
    %95 = vmatpush.msra.mxu0 %v88
    %96 = vmatpush.msra.mxu0 %v87
    %97 = vmatpush.msra.mxu0 %v86
    %98 = vmatpush.msra.mxu0 %v85
    %99 = vmatpush.msra.mxu0 %v84
    %100 = vmatpush.msra.mxu0 %v83
    %101 = vmatpush.msra.mxu0 %v82
    %102 = vmatpush.msra.mxu0 %v81
    %103 = vmatpush.msra.mxu0 %v80
    %104 = vmatpush.msra.mxu0 %v79
    %105 = vmatpush.msra.mxu0 %v78
    %106 = vmatpush.msra.mxu0 %v77
    %107 = vmatpush.msra.mxu0 %v76
    %108 = vmatpush.msra.mxu0 %v75
    %109 = vmatpush.msra.mxu0 %v74
    %110 = vmatmul.f32.gmra.mxu0 %v73
    %v111 = vpop.f32.mrf.mxu0
    %v112 = vadd.f32 %v92, %v111
    %113 = vdwg.mxu0
    %v114 = vmax.f32 %v112, 0.0
    %v115 = vld [vmem:[#allocation4] sm:$0xff]
    %v116 = vld [vmem:[#allocation4 + $0x8] sm:$0xff]
    %v117 = vld [vmem:[#allocation4 + $0x10] sm:$0xff]
    %v118 = vld [vmem:[#allocation4 + $0x18] sm:$0xff]
    %v119 = vld [vmem:[#allocation4 + $0x20] sm:$0xff]
    %v120 = vld [vmem:[#allocation4 + $0x28] sm:$0xff]
    %v121 = vld [vmem:[#allocation4 + $0x30] sm:$0xff]
    %v122 = vld [vmem:[#allocation4 + $0x38] sm:$0xff]
    %v123 = vld [vmem:[#allocation4 + $0x40] sm:$0xff]
    %v124 = vld [vmem:[#allocation4 + $0x48] sm:$0xff]
    %v125 = vld [vmem:[#allocation4 + $0x50] sm:$0xff]
    %v126 = vld [vmem:[#allocation4 + $0x58] sm:$0xff]
    %v127 = vld [vmem:[#allocation4 + $0x60] sm:$0xff]
    %v128 = vld [vmem:[#allocation4 + $0x68] sm:$0xff]
    %v129 = vld [vmem:[#allocation4 + $0x70] sm:$0xff]
    %v130 = vld [vmem:[#allocation4 + $0x78] sm:$0xff]
    %v131 = vld [vmem:[%s4] sm:$0x1]
    %v133 = vperm.slane %v131, 0
    %135 = vmatpush.msra.mxu0 %v130
    %136 = vmatpush.msra.mxu0 %v129
    %137 = vmatpush.msra.mxu0 %v128
    %138 = vmatpush.msra.mxu0 %v127
    %139 = vmatpush.msra.mxu0 %v126
    %140 = vmatpush.msra.mxu0 %v125
    %141 = vmatpush.msra.mxu0 %v124
    %142 = vmatpush.msra.mxu0 %v123
    %143 = vmatpush.msra.mxu0 %v122
    %144 = vmatpush.msra.mxu0 %v121
    %145 = vmatpush.msra.mxu0 %v120
    %146 = vmatpush.msra.mxu0 %v119
    %147 = vmatpush.msra.mxu0 %v118
    %148 = vmatpush.msra.mxu0 %v117
    %149 = vmatpush.msra.mxu0 %v116
    %150 = vmatpush.msra.mxu0 %v115
    %151 = vmatmul.f32.gmra.mxu0 %v114
    %v152 = vpop.f32.mrf.mxu0
    %v153 = vadd.f32 %v133, %v152
    %154 = vdwg.mxu0
    %v155 = vmax.f32 %v153, 0.0
    %v156 = vld [vmem:[#allocation6] sm:$0xff]
    %v157 = vld [vmem:[#allocation6 + $0x8] sm:$0xff]
    %v158 = vld [vmem:[#allocation6 + $0x10] sm:$0xff]
    %v159 = vld [vmem:[#allocation6 + $0x18] sm:$0xff]
    %v160 = vld [vmem:[#allocation6 + $0x20] sm:$0xff]
    %v161 = vld [vmem:[#allocation6 + $0x28] sm:$0xff]
    %v162 = vld [vmem:[#allocation6 + $0x30] sm:$0xff]
    %v163 = vld [vmem:[#allocation6 + $0x38] sm:$0xff]
    %v164 = vld [vmem:[#allocation6 + $0x40] sm:$0xff]
    %v165 = vld [vmem:[#allocation6 + $0x48] sm:$0xff]
    %v166 = vld [vmem:[#allocation6 + $0x50] sm:$0xff]
    %v167 = vld [vmem:[#allocation6 + $0x58] sm:$0xff]
    %v168 = vld [vmem:[#allocation6 + $0x60] sm:$0xff]
    %v169 = vld [vmem:[#allocation6 + $0x68] sm:$0xff]
    %v170 = vld [vmem:[#allocation6 + $0x70] sm:$0xff]
    %v171 = vld [vmem:[#allocation6 + $0x78] sm:$0xff]
    %v172 = vld [vmem:[%s6] sm:$0x1]
    %v174 = vperm.slane %v172, 0
    %176 = vmatpush.msra.mxu0 %v171
    %177 = vmatpush.msra.mxu0 %v170
    %178 = vmatpush.msra.mxu0 %v169
    %179 = vmatpush.msra.mxu0 %v168
    %180 = vmatpush.msra.mxu0 %v167
    %181 = vmatpush.msra.mxu0 %v166
    %182 = vmatpush.msra.mxu0 %v165
    %183 = vmatpush.msra.mxu0 %v164
    %184 = vmatpush.msra.mxu0 %v163
    %185 = vmatpush.msra.mxu0 %v162
    %186 = vmatpush.msra.mxu0 %v161
    %187 = vmatpush.msra.mxu0 %v160
    %188 = vmatpush.msra.mxu0 %v159
    %189 = vmatpush.msra.mxu0 %v158
    %190 = vmatpush.msra.mxu0 %v157
    %191 = vmatpush.msra.mxu0 %v156
    %192 = vmatmul.f32.gmra.mxu0 %v155
    %v193 = vpop.f32.mrf.mxu0
    %v194 = vadd.f32 %v174, %v193
    %195 = vdwg.mxu0
    %196 = vst [vmem:[%s7] sm:$0xff] %v194
    // Predicated region
    $region42: #{linear_qnet_forward.1} parent=1 // pred_check
      _
    $region43: #{linear_qnet_forward.1} parent=1 // pred_check_branch
      %198 = sbr.rel (0) target = $region45
    $region44: #{linear_qnet_forward.1} parent=1 // pred_region
      _
    $region45: #{linear_qnet_forward.1} parent=1 // pred_fallthru
      _
    // Predicated region
    $region46: #{linear_qnet_forward.1} parent=1 // pred_check
      _
    $region47: #{linear_qnet_forward.1} parent=1 // pred_check_branch
      %200 = sbr.rel (0) target = $region49
    $region48: #{linear_qnet_forward.1} parent=1 // pred_region
      _
    $region49: #{linear_qnet_forward.1} parent=1 // pred_fallthru
      _
    %201 = vsyncpa [#allocation3], 1
    %202 = vsyncpa [#allocation5], 1

// kernel: linear_qnet_forward.1
$region0: #{linear_qnet_forward.1}
  #allocation0 [shape = 'u32[]', space=smem, size = 0x4, offset = 0x4, fixed_abs, tag = 'smem constant byte address 0x4 - core index']
  #allocation1 [shape = 'u32[72,128]{1,0:T(1,128)}', space=vmem, size = 0x9000, scoped, tag = 'internal scratch']
  %s0 = inlined_call_operand.vmem [shape: f32[8,128], index: 0, kind: input, shape index: {}]
  %s1 = inlined_call_operand.hbm [shape: f32[128,128], index: 1, kind: input, shape index: {}]
  %s2 = inlined_call_operand.vmem [shape: f32[1,128], index: 2, kind: input, shape index: {}]
  %s3 = inlined_call_operand.hbm [shape: f32[128,128], index: 3, kind: input, shape index: {}]
  %s4 = inlined_call_operand.vmem [shape: f32[1,128], index: 4, kind: input, shape index: {}]
  %s5 = inlined_call_operand.hbm [shape: f32[128,128], index: 5, kind: input, shape index: {}]
  %s6 = inlined_call_operand.vmem [shape: f32[1,128], index: 6, kind: input, shape index: {}]
  %s7 = inlined_call_operand.vmem [shape: f32[8,128], index: 7, kind: output, shape index: {}]
  %s8 = sld [smem:[#allocation0]]
  $region50: #{linear_qnet_forward.1} parent=0
    _
  %s10 = ssub.s32 1, %s8
  %s11 = scalar_select 0, %s10, %s8
  $region1: #{linear_qnet_forward.1} parent=0
    #allocation2 [shape = 'u8[65536]{0}', space=vmem, size = 0x10000, scoped, tag = 'input window, operand 1, single buffered']
    #allocation3 [shape = 's32[1]{0}', space=sflag, size = 0x4, scoped, tag = 'scoped memory for linear_qnet_forward.1']
    #allocation4 [shape = 'u8[65536]{0}', space=vmem, size = 0x10000, scoped, tag = 'input window, operand 3, single buffered']
    #allocation5 [shape = 's32[1]{0}', space=sflag, size = 0x4, scoped, tag = 'scoped memory for linear_qnet_forward.1']
    #allocation6 [shape = 'u8[65536]{0}', space=vmem, size = 0x10000, scoped, tag = 'input window, operand 5, single buffered']
    %12 = vsyncpa [#allocation3], 0
    %13 = vsyncpa [#allocation5], 0
    // Predicated region
    $region2: #{linear_qnet_forward.1} parent=1 // pred_check
      _
    $region3: #{linear_qnet_forward.1} parent=1 // pred_check_branch
      %15 = sbr.rel (0) target = $region5
    $region4: #{linear_qnet_forward.1} parent=1 // pred_region
      _
    $region5: #{linear_qnet_forward.1} parent=1 // pred_fallthru
      _
    // Predicated region
    $region6: #{linear_qnet_forward.1} parent=1 // pred_check
      _
    $region7: #{linear_qnet_forward.1} parent=1 // pred_check_branch
      %17 = sbr.rel (0) target = $region9
    $region8: #{linear_qnet_forward.1} parent=1 // pred_region
      %19 = vsyncadd [#allocation3], 0
      %s20 = sshll.u32 %s1, 4
      %s21 = int_to_ptr.hbm [resolvable:$true] %s20
      %s22 = sshll.u32 [#allocation2], 4
      %s23 = int_to_ptr.vmem [resolvable:$true] %s22
      %28 = dma.hbm_to_vmem [thread:$0]  %s21, 2048, %s23, [#allocation3], 128, 128, 8
    $region9: #{linear_qnet_forward.1} parent=1 // pred_fallthru
      _
    // Predicated region
    $region10: #{linear_qnet_forward.1} parent=1 // pred_check
      _
    $region11: #{linear_qnet_forward.1} parent=1 // pred_check_branch
      %30 = sbr.rel (0) target = $region13
    $region12: #{linear_qnet_forward.1} parent=1 // pred_region
      _
    $region13: #{linear_qnet_forward.1} parent=1 // pred_fallthru
      _
    // Predicated region
    $region14: #{linear_qnet_forward.1} parent=1 // pred_check
      _
    $region15: #{linear_qnet_forward.1} parent=1 // pred_check_branch
      %32 = sbr.rel (0) target = $region17
    $region16: #{linear_qnet_forward.1} parent=1 // pred_region
      %34 = vsyncadd [#allocation5], 0
      %s35 = sshll.u32 %s3, 4
      %s36 = int_to_ptr.hbm [resolvable:$true] %s35
      %s37 = sshll.u32 [#allocation4], 4
      %s38 = int_to_ptr.vmem [resolvable:$true] %s37
      %43 = dma.hbm_to_vmem [thread:$0]  %s36, 2048, %s38, [#allocation5], 128, 128, 8
    $region17: #{linear_qnet_forward.1} parent=1 // pred_fallthru
      _
    // Predicated region
    $region18: #{linear_qnet_forward.1} parent=1 // pred_check
      _
    $region19: #{linear_qnet_forward.1} parent=1 // pred_check_branch
      %45 = sbr.rel (0) target = $region21
    $region20: #{linear_qnet_forward.1} parent=1 // pred_region
      _
    $region21: #{linear_qnet_forward.1} parent=1 // pred_fallthru
      _
    // Predicated region
    $region22: #{linear_qnet_forward.1} parent=1 // pred_check
      _
    $region23: #{linear_qnet_forward.1} parent=1 // pred_check_branch
      %47 = sbr.rel (0) target = $region25
    $region24: #{linear_qnet_forward.1} parent=1 // pred_region
      %49 = vsyncadd [#allocation5], 0
      %s50 = sshll.u32 %s5, 4
      %s51 = int_to_ptr.hbm [resolvable:$true] %s50
      %s52 = sshll.u32 [#allocation6], 4
      %s53 = int_to_ptr.vmem [resolvable:$true] %s52
      %58 = dma.hbm_to_vmem [thread:$0]  %s51, 2048, %s53, [#allocation5], 128, 128, 8
    $region25: #{linear_qnet_forward.1} parent=1 // pred_fallthru
      _
    // Predicated region
    $region26: #{linear_qnet_forward.1} parent=1 // pred_check
      _
    $region27: #{linear_qnet_forward.1} parent=1 // pred_check_branch
      %60 = sbr.rel (0) target = $region29
    $region28: #{linear_qnet_forward.1} parent=1 // pred_region
      _
    $region29: #{linear_qnet_forward.1} parent=1 // pred_fallthru
      _
    // Predicated region
    $region30: #{linear_qnet_forward.1} parent=1 // pred_check
      _
    $region31: #{linear_qnet_forward.1} parent=1 // pred_check_branch
      %62 = sbr.rel (0) target = $region33
    $region32: #{linear_qnet_forward.1} parent=1 // pred_region
      %64 = dma.done [#allocation3], 2048
    $region33: #{linear_qnet_forward.1} parent=1 // pred_fallthru
      _
    // Predicated region
    $region34: #{linear_qnet_forward.1} parent=1 // pred_check
      _
    $region35: #{linear_qnet_forward.1} parent=1 // pred_check_branch
      %66 = sbr.rel (0) target = $region37
    $region36: #{linear_qnet_forward.1} parent=1 // pred_region
      %68 = dma.done [#allocation5], 2048
    $region37: #{linear_qnet_forward.1} parent=1 // pred_fallthru
      _
    // Predicated region
    $region38: #{linear_qnet_forward.1} parent=1 // pred_check
      _
    $region39: #{linear_qnet_forward.1} parent=1 // pred_check_branch
      %70 = sbr.rel (0) target = $region41
    $region40: #{linear_qnet_forward.1} parent=1 // pred_region
      %72 = dma.done [#allocation5], 2048
    $region41: #{linear_qnet_forward.1} parent=1 // pred_fallthru
      _
    %v73 = vld [vmem:[%s0] sm:$0xff]
    %v74 = vld [vmem:[#allocation2] sm:$0xff]
    %v75 = vld [vmem:[#allocation2 + $0x8] sm:$0xff]
    %v76 = vld [vmem:[#allocation2 + $0x10] sm:$0xff]
    %v77 = vld [vmem:[#allocation2 + $0x18] sm:$0xff]
    %v78 = vld [vmem:[#allocation2 + $0x20] sm:$0xff]
    %v79 = vld [vmem:[#allocation2 + $0x28] sm:$0xff]
    %v80 = vld [vmem:[#allocation2 + $0x30] sm:$0xff]
    %v81 = vld [vmem:[#allocation2 + $0x38] sm:$0xff]
    %v82 = vld [vmem:[#allocation2 + $0x40] sm:$0xff]
    %v83 = vld [vmem:[#allocation2 + $0x48] sm:$0xff]
    %v84 = vld [vmem:[#allocation2 + $0x50] sm:$0xff]
    %v85 = vld [vmem:[#allocation2 + $0x58] sm:$0xff]
    %v86 = vld [vmem:[#allocation2 + $0x60] sm:$0xff]
    %v87 = vld [vmem:[#allocation2 + $0x68] sm:$0xff]
    %v88 = vld [vmem:[#allocation2 + $0x70] sm:$0xff]
    %v89 = vld [vmem:[#allocation2 + $0x78] sm:$0xff]
    %v90 = vld [vmem:[%s2] sm:$0x1]
    %v92 = vperm.slane %v90, 0
    %94 = vmatpush.msra.mxu0 %v89
    %95 = vmatpush.msra.mxu0 %v88
    %96 = vmatpush.msra.mxu0 %v87
    %97 = vmatpush.msra.mxu0 %v86
    %98 = vmatpush.msra.mxu0 %v85
    %99 = vmatpush.msra.mxu0 %v84
    %100 = vmatpush.msra.mxu0 %v83
    %101 = vmatpush.msra.mxu0 %v82
    %102 = vmatpush.msra.mxu0 %v81
    %103 = vmatpush.msra.mxu0 %v80
    %104 = vmatpush.msra.mxu0 %v79
    %105 = vmatpush.msra.mxu0 %v78
    %106 = vmatpush.msra.mxu0 %v77
    %107 = vmatpush.msra.mxu0 %v76
    %108 = vmatpush.msra.mxu0 %v75
    %109 = vmatpush.msra.mxu0 %v74
    %110 = vmatmul.f32.gmra.mxu0 %v73
    %v111 = vpop.f32.mrf.mxu0
    %v112 = vadd.f32 %v92, %v111
    %113 = vdwg.mxu0
    %v114 = vmax.f32 %v112, 0.0
    %v115 = vld [vmem:[#allocation4] sm:$0xff]
    %v116 = vld [vmem:[#allocation4 + $0x8] sm:$0xff]
    %v117 = vld [vmem:[#allocation4 + $0x10] sm:$0xff]
    %v118 = vld [vmem:[#allocation4 + $0x18] sm:$0xff]
    %v119 = vld [vmem:[#allocation4 + $0x20] sm:$0xff]
    %v120 = vld [vmem:[#allocation4 + $0x28] sm:$0xff]
    %v121 = vld [vmem:[#allocation4 + $0x30] sm:$0xff]
    %v122 = vld [vmem:[#allocation4 + $0x38] sm:$0xff]
    %v123 = vld [vmem:[#allocation4 + $0x40] sm:$0xff]
    %v124 = vld [vmem:[#allocation4 + $0x48] sm:$0xff]
    %v125 = vld [vmem:[#allocation4 + $0x50] sm:$0xff]
    %v126 = vld [vmem:[#allocation4 + $0x58] sm:$0xff]
    %v127 = vld [vmem:[#allocation4 + $0x60] sm:$0xff]
    %v128 = vld [vmem:[#allocation4 + $0x68] sm:$0xff]
    %v129 = vld [vmem:[#allocation4 + $0x70] sm:$0xff]
    %v130 = vld [vmem:[#allocation4 + $0x78] sm:$0xff]
    %v131 = vld [vmem:[%s4] sm:$0x1]
    %v133 = vperm.slane %v131, 0
    %135 = vmatpush.msra.mxu0 %v130
    %136 = vmatpush.msra.mxu0 %v129
    %137 = vmatpush.msra.mxu0 %v128
    %138 = vmatpush.msra.mxu0 %v127
    %139 = vmatpush.msra.mxu0 %v126
    %140 = vmatpush.msra.mxu0 %v125
    %141 = vmatpush.msra.mxu0 %v124
    %142 = vmatpush.msra.mxu0 %v123
    %143 = vmatpush.msra.mxu0 %v122
    %144 = vmatpush.msra.mxu0 %v121
    %145 = vmatpush.msra.mxu0 %v120
    %146 = vmatpush.msra.mxu0 %v119
    %147 = vmatpush.msra.mxu0 %v118
    %148 = vmatpush.msra.mxu0 %v117
    %149 = vmatpush.msra.mxu0 %v116
    %150 = vmatpush.msra.mxu0 %v115
    %151 = vmatmul.f32.gmra.mxu0 %v114
    %v152 = vpop.f32.mrf.mxu0
    %v153 = vadd.f32 %v133, %v152
    %154 = vdwg.mxu0
    %v155 = vmax.f32 %v153, 0.0
    %v156 = vld [vmem:[#allocation6] sm:$0xff]
    %v157 = vld [vmem:[#allocation6 + $0x8] sm:$0xff]
    %v158 = vld [vmem:[#allocation6 + $0x10] sm:$0xff]
    %v159 = vld [vmem:[#allocation6 + $0x18] sm:$0xff]
    %v160 = vld [vmem:[#allocation6 + $0x20] sm:$0xff]
    %v161 = vld [vmem:[#allocation6 + $0x28] sm:$0xff]
    %v162 = vld [vmem:[#allocation6 + $0x30] sm:$0xff]
    %v163 = vld [vmem:[#allocation6 + $0x38] sm:$0xff]
    %v164 = vld [vmem:[#allocation6 + $0x40] sm:$0xff]
    %v165 = vld [vmem:[#allocation6 + $0x48] sm:$0xff]
    %v166 = vld [vmem:[#allocation6 + $0x50] sm:$0xff]
    %v167 = vld [vmem:[#allocation6 + $0x58] sm:$0xff]
    %v168 = vld [vmem:[#allocation6 + $0x60] sm:$0xff]
    %v169 = vld [vmem:[#allocation6 + $0x68] sm:$0xff]
    %v170 = vld [vmem:[#allocation6 + $0x70] sm:$0xff]
    %v171 = vld [vmem:[#allocation6 + $0x78] sm:$0xff]
    %v172 = vld [vmem:[%s6] sm:$0x1]
    %v174 = vperm.slane %v172, 0
    %176 = vmatpush.msra.mxu0 %v171
    %177 = vmatpush.msra.mxu0 %v170
    %178 = vmatpush.msra.mxu0 %v169
    %179 = vmatpush.msra.mxu0 %v168
    %180 = vmatpush.msra.mxu0 %v167
    %181 = vmatpush.msra.mxu0 %v166
    %182 = vmatpush.msra.mxu0 %v165
    %183 = vmatpush.msra.mxu0 %v164
    %184 = vmatpush.msra.mxu0 %v163
    %185 = vmatpush.msra.mxu0 %v162
    %186 = vmatpush.msra.mxu0 %v161
    %187 = vmatpush.msra.mxu0 %v160
    %188 = vmatpush.msra.mxu0 %v159
    %189 = vmatpush.msra.mxu0 %v158
    %190 = vmatpush.msra.mxu0 %v157
    %191 = vmatpush.msra.mxu0 %v156
    %192 = vmatmul.f32.gmra.mxu0 %v155
    %v193 = vpop.f32.mrf.mxu0
    %v194 = vadd.f32 %v174, %v193
    %195 = vdwg.mxu0
    %196 = vst [vmem:[%s7] sm:$0xff] %v194
    // Predicated region
    $region42: #{linear_qnet_forward.1} parent=1 // pred_check
      _
    $region43: #{linear_qnet_forward.1} parent=1 // pred_check_branch
      %198 = sbr.rel (0) target = $region45
    $region44: #{linear_qnet_forward.1} parent=1 // pred_region
      _
    $region45: #{linear_qnet_forward.1} parent=1 // pred_fallthru
      _
    // Predicated region
    $region46: #{linear_qnet_forward.1} parent=1 // pred_check
      _
    $region47: #{linear_qnet_forward.1} parent=1 // pred_check_branch
      %200 = sbr.rel (0) target = $region49
    $region48: #{linear_qnet_forward.1} parent=1 // pred_region
      _
    $region49: #{linear_qnet_forward.1} parent=1 // pred_fallthru
      _
    %201 = vsyncpa [#allocation3], 1
    %202 = vsyncpa [#allocation5], 1

</llo_original>
